<compile_context>
chip_gen: v6e
topology: v6e:2x2x1
jax: 0.10.0
libtpu: 0.0.40
codegen_flags: <defaults>
</compile_context>

<pallas_src>
import jax
import jax.numpy as jnp
from jax.experimental import pallas as pl
from jax.experimental.pallas import tpu as pltpu

# ---- hyper-parameters (mirror MambaBlock / mamba_ssm Mamba2 __init__) ----
D_MODEL    = 32            # hidden_size of the (synthetic) FinBERT backbone
D_STATE    = 16
D_CONV     = 4
EXPAND     = 2
HEADDIM    = 64            # mamba_ssm Mamba2 default
NGROUPS    = 1             # mamba_ssm Mamba2 default
D_INNER    = EXPAND * D_MODEL                    # 64
NHEADS     = D_INNER // HEADDIM                  # 1
CONV_DIM   = D_INNER + 2 * NGROUPS * D_STATE     # 96
D_IN_PROJ  = 2 * D_INNER + 2 * NGROUPS * D_STATE + NHEADS   # 161
D_MLP      = 4 * D_MODEL                         # 128
NUM_LABELS = 3
CLF_PAD    = 128           # lane-dense logits slab (sliced back in wrapper)
RMS_EPS    = 1e-6
GATED_NORM_EPS = 1e-5      # mamba_ssm RMSNormGated default

# fused in_proj layout (lane offsets inside the (32, FUSE_W) weight)
FUSE_XBC_OFF = 0           # xBC: lanes 0..95   (vreg-0 aligned)
FUSE_DT_OFF  = 96          # dt : lane  96
FUSE_Z_OFF   = 128         # z  : lanes 128..191 (vreg-1 aligned)
FUSE_W       = 256

MAX_BATCH_TILE = 1024      # rows per grid step (multiple of 8)


def _round_up(x, m):
    return ((x + m - 1) // m) * m


def _ref_rmsnorm(x, w, eps):
    # Reproduces the reference RMSNorm *exactly*: `norm.pow(2).mean(-1)` is a
    # mean over a keepdim size-1 axis (a no-op), so
    #   rms = sqrt(sum_d x_d^2 + eps)   (no division by d_model).
    # Implemented with rsqrt (EUP) instead of sqrt + divide (VALU).
    return x * jax.lax.rsqrt(jnp.sum(x * x, axis=-1, keepdims=True) + eps) * w


def _silu(x):
    return x * jax.nn.sigmoid(x)


def _gelu_exact(x):
    # torch.nn.GELU default = exact erf form
    return 0.5 * x * (1.0 + jax.lax.erf(x * 0.7071067811865476))


def adapter_kernel(cls_ref,
                   n1w_ref, win_ref, ctap_ref, cbias_ref,
                   dtb_ref, dpar_ref, mnw_ref, outw_ref,
                   n2w_ref, w1_ref, b1_ref, w2_ref, b2_ref,
                   clfw_ref, clfb_ref,
                   out_ref):
    # Padded batch rows (b_pad > B) are zeros: rsqrt(0+eps) / softplus stay
    # finite, and the wrapper slices them off.
    cls = cls_ref[...].astype(jnp.float32)                     # (TB, D_MODEL)

    # ---------------- MambaBlock.norm1 ----------------
    u = _ref_rmsnorm(cls, n1w_ref[...], RMS_EPS)

    # ---------------- Mamba2 (seqlen == 1) ----------------
    # single fused bf16 in_proj dot; columns [xBC | dt | pad | z | pad]
    proj = jnp.dot(u.astype(jnp.bfloat16), win_ref[...],
                   preferred_element_type=jnp.float32)          # (TB, FUSE_W)

    xbc = proj[:, FUSE_XBC_OFF:FUSE_XBC_OFF + CONV_DIM]         # (TB, 96)
    dt  = proj[:, FUSE_DT_OFF:FUSE_DT_OFF + NHEADS]             # (TB, 1)
    z   = proj[:, FUSE_Z_OFF:FUSE_Z_OFF + D_INNER]              # (TB, 64)

    # causal depthwise conv1d with left padding (d_conv-1): for L == 1 only
    # the last tap sees real data -> one fused FMA + SiLU over the 96 xBC lanes
    xbc = _silu(xbc * ctap_ref[...] + cbias_ref[...])
    x_act = xbc[:, :D_INNER]                                    # (TB, 64)
    Bm    = xbc[:, D_INNER:D_INNER + D_STATE]                   # (TB, 16)
    Cm    = xbc[:, D_INNER + D_STATE:]                          # (TB, 16)

    dt = jax.nn.softplus(dt + dtb_ref[...])                     # (TB, NHEADS)
    # SSD single step with zero initial state: the decay exp(dt * A) never
    # touches the output (h_{-1} = 0), so A_log is not needed for L == 1.
    cb = jnp.sum(Bm * Cm, axis=-1, keepdims=True)               # (TB, 1)
    scale = dt * cb + dpar_ref[...]                             # (TB, NHEADS)
    if NHEADS == 1:
        y = x_act * scale
    else:
        y = x_act * jnp.repeat(scale, HEADDIM, axis=-1)

    # gated RMSNorm (norm_before_gate=False): rmsnorm(y * silu(z)) * weight
    yz = y * _silu(z)
    gr = yz * jax.lax.rsqrt(jnp.mean(yz * yz, axis=-1, keepdims=True)
                            + GATED_NORM_EPS) * mnw_ref[...]
    mamba_out = jnp.dot(gr.astype(jnp.bfloat16), outw_ref[...],
                        preferred_element_type=jnp.float32)     # (TB, D_MODEL)

    # residual 1 (dropout == identity in eval mode)
    x1 = cls + mamba_out

    # ---------------- MambaBlock.norm2 + MLP ----------------
    n2 = _ref_rmsnorm(x1, n2w_ref[...], RMS_EPS)
    h = jnp.dot(n2.astype(jnp.bfloat16), w1_ref[...],
                preferred_element_type=jnp.float32) + b1_ref[...]
    h = _gelu_exact(h)
    mlp_out = jnp.dot(h.astype(jnp.bfloat16), w2_ref[...],
                      preferred_element_type=jnp.float32) + b2_ref[...]
    adapter_out = x1 + mlp_out

    # ---------------- combined + classifier (lane-padded, bf16 store) -------
    combined = cls + adapter_out
    logits = jnp.dot(combined.astype(jnp.bfloat16), clfw_ref[...],
                     preferred_element_type=jnp.float32) + clfb_ref[...]
    out_ref[...] = logits.astype(out_ref.dtype)


def finbert_mamba_adapter(hidden_states, kp):
    # TODO(synk): the frozen HuggingFace FinBERT encoder
    # (AutoModel.from_pretrained) has no clean Pallas equivalent; it is
    # represented by the precomputed `hidden_states` it would have produced.
    cls = hidden_states[:, 0, :].astype(jnp.float32)            # (B, D_MODEL)
    B = cls.shape[0]

    b_pad0 = _round_up(B, 8)
    # >=2 grid steps whenever the batch allows it (second TensorCore on v7x),
    # capped at MAX_BATCH_TILE rows per step.
    tb = min(MAX_BATCH_TILE, max(8, _round_up(pl.cdiv(b_pad0, 2), 8)))
    b_pad = _round_up(B, tb)
    if b_pad != B:
        # padded rows are zeros (finite through softplus/rsqrt, sliced off)
        cls = jnp.pad(cls, ((0, b_pad - B), (0, 0)))
    grid = (b_pad // tb,)

    weight_args = (
        kp["norm1_w"], kp["w_in"], kp["conv_tap"], kp["conv_b"],
        kp["dt_bias"], kp["D"], kp["mamba_norm_w"], kp["out_w"],
        kp["norm2_w"], kp["mlp_w1"], kp["mlp_b1"], kp["mlp_w2"], kp["mlp_b2"],
        kp["clf_w"], kp["clf_b"],
    )

    in_specs = [pl.BlockSpec((tb, D_MODEL), lambda i: (i, 0))]
    # constant index_map -> weights stay resident in VMEM across the grid
    in_specs += [pl.BlockSpec(w.shape, lambda i: (0, 0)) for w in weight_args]

    flops_row = 2 * (D_MODEL * FUSE_W + D_INNER * D_MODEL
                     + D_MODEL * D_MLP + D_MLP * D_MODEL + D_MODEL * CLF_PAD)
    weight_bytes = sum(int(w.size) * w.dtype.itemsize for w in weight_args)
    cost = pl.CostEstimate(
        flops=int(b_pad) * flops_row,
        transcendentals=int(b_pad) * (CONV_DIM + D_INNER + D_MLP + 8),
        bytes_accessed=int(b_pad) * (D_MODEL * 4 + CLF_PAD * 2)
                       + weight_bytes * grid[0],
    )

    out = pl.pallas_call(
        adapter_kernel,
        out_shape=jax.ShapeDtypeStruct((b_pad, CLF_PAD), jnp.bfloat16),
        grid_spec=pltpu.PrefetchScalarGridSpec(
            num_scalar_prefetch=0,
            grid=grid,
            in_specs=in_specs,
            out_specs=pl.BlockSpec((tb, CLF_PAD), lambda i: (i, 0)),
        ),
        compiler_params=pltpu.CompilerParams(
            dimension_semantics=("parallel",)),
        cost_estimate=cost,
    )(cls, *weight_args)

    return out[:B, :NUM_LABELS].astype(jnp.float32)


# --------------------------- parameters ------------------------------------
def init_params(key):
    """Torch-layout parameters (Linear weights are (out_features, in_features))."""
    ks = jax.random.split(key, 12)

    def lin(k, shape, scale=0.05):
        return (scale * jax.random.normal(k, shape)).astype(jnp.float32)

    p = {}
    p["norm1_w"]      = jnp.ones((1, D_MODEL), jnp.float32)
    p["norm2_w"]      = jnp.ones((1, D_MODEL), jnp.float32)
    p["in_proj_w"]    = lin(ks[0], (D_IN_PROJ, D_MODEL))       # torch (out, in)
    conv_w            = lin(ks[1], (CONV_DIM, D_CONV))         # depthwise taps
    p["conv_tap"]     = conv_w[:, D_CONV - 1].reshape(1, CONV_DIM)  # last tap
    p["conv_b"]       = lin(ks[2], (1, CONV_DIM))
    p["dt_bias"]      = lin(ks[3], (1, NHEADS))
    p["D"]            = jnp.ones((1, NHEADS), jnp.float32)
    p["mamba_norm_w"] = jnp.ones((1, D_INNER), jnp.float32)
    p["out_proj_w"]   = lin(ks[4], (D_MODEL, D_INNER))
    p["mlp_w1"]       = lin(ks[5], (D_MLP, D_MODEL))
    p["mlp_b1"]       = lin(ks[6], (1, D_MLP))
    p["mlp_w2"]       = lin(ks[7], (D_MODEL, D_MLP))
    p["mlp_b2"]       = lin(ks[8], (1, D_MODEL))
    p["clf_w"]        = lin(ks[9], (NUM_LABELS, D_MODEL))
    p["clf_b"]        = lin(ks[10], (1, NUM_LABELS))
    return p


def to_kernel_params(p):
    """One-time host-side re-layout: transpose matmul weights to (in, out),
    fuse the in_proj [z|x|B|C|dt] columns into one lane-padded bf16 weight
    laid out [xBC | dt | pad | z | pad], keep the (1, 96) conv tap/bias fused,
    and lane-pad the classifier head to 128 columns."""
    kp = {}
    kp["norm1_w"] = p["norm1_w"]
    kp["norm2_w"] = p["norm2_w"]

    # in_proj: torch rows are [z(64) | x(64) | B(16) | C(16) | dt(1)]
    Wt = p["in_proj_w"].T.astype(jnp.float32)                  # (D_MODEL, 161)
    w_fused = jnp.zeros((D_MODEL, FUSE_W), jnp.float32)
    w_fused = w_fused.at[:, FUSE_XBC_OFF:FUSE_XBC_OFF + CONV_DIM].set(
        Wt[:, D_INNER:D_INNER + CONV_DIM])                     # xBC
    w_fused = w_fused.at[:, FUSE_DT_OFF:FUSE_DT_OFF + NHEADS].set(
        Wt[:, D_INNER + CONV_DIM:])                            # dt
    w_fused = w_fused.at[:, FUSE_Z_OFF:FUSE_Z_OFF + D_INNER].set(
        Wt[:, :D_INNER])                                       # z
    kp["w_in"] = w_fused.astype(jnp.bfloat16)

    # depthwise conv channels are ordered [x(64) | B(16) | C(16)] — same order
    # as the fused xBC slice, so a single (1, 96) tap / bias pair suffices.
    kp["conv_tap"] = p["conv_tap"]
    kp["conv_b"]   = p["conv_b"]

    kp["dt_bias"]      = p["dt_bias"]
    kp["D"]            = p["D"]
    kp["mamba_norm_w"] = p["mamba_norm_w"]
    kp["out_w"]        = p["out_proj_w"].T.astype(jnp.bfloat16)   # (64, 32)
    kp["mlp_w1"]       = p["mlp_w1"].T.astype(jnp.bfloat16)       # (32, 128)
    kp["mlp_b1"]       = p["mlp_b1"]
    kp["mlp_w2"]       = p["mlp_w2"].T.astype(jnp.bfloat16)       # (128, 32)
    kp["mlp_b2"]       = p["mlp_b2"]
    clf_w = p["clf_w"].T                                          # (32, 3)
    kp["clf_w"] = jnp.pad(
        clf_w, ((0, 0), (0, CLF_PAD - NUM_LABELS))).astype(jnp.bfloat16)
    kp["clf_b"] = jnp.pad(p["clf_b"], ((0, 0), (0, CLF_PAD - NUM_LABELS)))
    return kp


if __name__ == "__main__":
    key = jax.random.PRNGKey(0)
    pkey, hkey = jax.random.split(key)
    params = to_kernel_params(init_params(pkey))

    B, S = 2, 8
    hidden_states = jax.random.normal(hkey, (B, S, D_MODEL), jnp.float32)

    logits = finbert_mamba_adapter(hidden_states, params)
    jax.block_until_ready(logits)
    assert logits.shape == (B, NUM_LABELS)
    assert bool(jnp.all(jnp.isfinite(logits)))
    print("KERNEL_OK")
</pallas_src>

<mosaic_0001>
module attributes {stable_mosaic.version = 11 : i64} {
  func.func @adapter_kernel(%arg0: i32, %arg1: memref<8x32xf32, #tpu.memory_space<vmem>>, %arg2: memref<1x32xf32, #tpu.memory_space<vmem>>, %arg3: memref<32x256xbf16, #tpu.memory_space<vmem>>, %arg4: memref<1x96xf32, #tpu.memory_space<vmem>>, %arg5: memref<1x96xf32, #tpu.memory_space<vmem>>, %arg6: memref<1x1xf32, #tpu.memory_space<vmem>>, %arg7: memref<1x1xf32, #tpu.memory_space<vmem>>, %arg8: memref<1x64xf32, #tpu.memory_space<vmem>>, %arg9: memref<64x32xbf16, #tpu.memory_space<vmem>>, %arg10: memref<1x32xf32, #tpu.memory_space<vmem>>, %arg11: memref<32x128xbf16, #tpu.memory_space<vmem>>, %arg12: memref<1x128xf32, #tpu.memory_space<vmem>>, %arg13: memref<128x32xbf16, #tpu.memory_space<vmem>>, %arg14: memref<1x32xf32, #tpu.memory_space<vmem>>, %arg15: memref<32x128xbf16, #tpu.memory_space<vmem>>, %arg16: memref<1x128xf32, #tpu.memory_space<vmem>>, %arg17: memref<8x128xbf16, #tpu.memory_space<vmem>>) attributes {dimension_semantics = [#tpu.dimension_semantics<parallel>], iteration_bounds = array<i64: 1>, scalar_prefetch = 0 : i64, scratch_operands = 0 : i64, tpu.core_type = #tpu.core_type<tc>, window_params = [{transform_indices = @transform_0, window_bounds = array<i64: 8, 32>}, {pipeline_mode = #tpu.pipeline_mode<synchronous>, transform_indices = @transform_1, window_bounds = array<i64: 1, 32>}, {pipeline_mode = #tpu.pipeline_mode<synchronous>, transform_indices = @transform_2, window_bounds = array<i64: 32, 256>}, {pipeline_mode = #tpu.pipeline_mode<synchronous>, transform_indices = @transform_3, window_bounds = array<i64: 1, 96>}, {pipeline_mode = #tpu.pipeline_mode<synchronous>, transform_indices = @transform_4, window_bounds = array<i64: 1, 96>}, {pipeline_mode = #tpu.pipeline_mode<synchronous>, transform_indices = @transform_5, window_bounds = array<i64: 1, 1>}, {pipeline_mode = #tpu.pipeline_mode<synchronous>, transform_indices = @transform_6, window_bounds = array<i64: 1, 1>}, {pipeline_mode = #tpu.pipeline_mode<synchronous>, transform_indices = @transform_7, window_bounds = array<i64: 1, 64>}, {pipeline_mode = #tpu.pipeline_mode<synchronous>, transform_indices = @transform_8, window_bounds = array<i64: 64, 32>}, {pipeline_mode = #tpu.pipeline_mode<synchronous>, transform_indices = @transform_9, window_bounds = array<i64: 1, 32>}, {pipeline_mode = #tpu.pipeline_mode<synchronous>, transform_indices = @transform_10, window_bounds = array<i64: 32, 128>}, {pipeline_mode = #tpu.pipeline_mode<synchronous>, transform_indices = @transform_11, window_bounds = array<i64: 1, 128>}, {pipeline_mode = #tpu.pipeline_mode<synchronous>, transform_indices = @transform_12, window_bounds = array<i64: 128, 32>}, {pipeline_mode = #tpu.pipeline_mode<synchronous>, transform_indices = @transform_13, window_bounds = array<i64: 1, 32>}, {pipeline_mode = #tpu.pipeline_mode<synchronous>, transform_indices = @transform_14, window_bounds = array<i64: 32, 128>}, {pipeline_mode = #tpu.pipeline_mode<synchronous>, transform_indices = @transform_15, window_bounds = array<i64: 1, 128>}, {transform_indices = @transform_16, window_bounds = array<i64: 8, 128>}]} {
    %c0 = arith.constant 0 : index
    %c0_0 = arith.constant 0 : index
    %0 = vector.load %arg1[%c0, %c0_0] : memref<8x32xf32, #tpu.memory_space<vmem>>, vector<8x32xf32>
    %c0_1 = arith.constant 0 : index
    %c0_2 = arith.constant 0 : index
    %1 = vector.load %arg2[%c0_1, %c0_2] : memref<1x32xf32, #tpu.memory_space<vmem>>, vector<1x32xf32>
    %2 = arith.mulf %0, %0 : vector<8x32xf32>
    %cst = arith.constant dense<0.000000e+00> : vector<8xf32>
    %3 = vector.multi_reduction <add>, %2, %cst [1] : vector<8x32xf32> to vector<8xf32>
    %4 = vector.shape_cast %3 : vector<8xf32> to vector<8x1xf32>
    %cst_3 = arith.constant 9.99999997E-7 : f32
    %5 = vector.broadcast %cst_3 : f32 to vector<8x1xf32>
    %6 = arith.addf %4, %5 : vector<8x1xf32>
    %7 = math.rsqrt %6 : vector<8x1xf32>
    %8 = vector.broadcast %7 : vector<8x1xf32> to vector<8x32xf32>
    %9 = arith.mulf %0, %8 : vector<8x32xf32>
    %10 = vector.broadcast %1 : vector<1x32xf32> to vector<8x32xf32>
    %11 = arith.mulf %9, %10 : vector<8x32xf32>
    %12 = arith.truncf %11 : vector<8x32xf32> to vector<8x32xbf16>
    %c0_4 = arith.constant 0 : index
    %c0_5 = arith.constant 0 : index
    %13 = vector.load %arg3[%c0_4, %c0_5] : memref<32x256xbf16, #tpu.memory_space<vmem>>, vector<32x256xbf16>
    %cst_6 = arith.constant dense<0.000000e+00> : vector<8x256xf32>
    %14 = tpu.matmul %12, %13, %cst_6 {dimension_numbers = #tpu.dot_dimension_numbers<[1], [0], [0], [1], [0, 0, 1, 1], [], []>} : vector<8x32xbf16>, vector<32x256xbf16>, vector<8x256xf32> -> vector<8x256xf32>
    %15 = vector.extract_strided_slice %14 {offsets = [0, 0], sizes = [8, 96], strides = [1, 1]} : vector<8x256xf32> to vector<8x96xf32>
    %16 = vector.extract_strided_slice %14 {offsets = [0, 96], sizes = [8, 1], strides = [1, 1]} : vector<8x256xf32> to vector<8x1xf32>
    %17 = vector.extract_strided_slice %14 {offsets = [0, 128], sizes = [8, 64], strides = [1, 1]} : vector<8x256xf32> to vector<8x64xf32>
    %c0_7 = arith.constant 0 : index
    %c0_8 = arith.constant 0 : index
    %18 = vector.load %arg4[%c0_7, %c0_8] : memref<1x96xf32, #tpu.memory_space<vmem>>, vector<1x96xf32>
    %19 = vector.broadcast %18 : vector<1x96xf32> to vector<8x96xf32>
    %20 = arith.mulf %15, %19 : vector<8x96xf32>
    %c0_9 = arith.constant 0 : index
    %c0_10 = arith.constant 0 : index
    %21 = vector.load %arg5[%c0_9, %c0_10] : memref<1x96xf32, #tpu.memory_space<vmem>>, vector<1x96xf32>
    %22 = vector.broadcast %21 : vector<1x96xf32> to vector<8x96xf32>
    %23 = arith.addf %20, %22 : vector<8x96xf32>
    %24 = arith.negf %23 : vector<8x96xf32>
    %25 = math.exp %24 : vector<8x96xf32>
    %cst_11 = arith.constant 1.000000e+00 : f32
    %26 = vector.broadcast %cst_11 : f32 to vector<8x96xf32>
    %27 = arith.addf %26, %25 : vector<8x96xf32>
    %28 = arith.divf %26, %27 : vector<8x96xf32>
    %29 = arith.mulf %23, %28 : vector<8x96xf32>
    %30 = vector.extract_strided_slice %29 {offsets = [0, 0], sizes = [8, 64], strides = [1, 1]} : vector<8x96xf32> to vector<8x64xf32>
    %31 = vector.extract_strided_slice %29 {offsets = [0, 64], sizes = [8, 16], strides = [1, 1]} : vector<8x96xf32> to vector<8x16xf32>
    %32 = vector.extract_strided_slice %29 {offsets = [0, 80], sizes = [8, 16], strides = [1, 1]} : vector<8x96xf32> to vector<8x16xf32>
    %c0_12 = arith.constant 0 : index
    %c0_13 = arith.constant 0 : index
    %33 = vector.load %arg6[%c0_12, %c0_13] : memref<1x1xf32, #tpu.memory_space<vmem>>, vector<1x1xf32>
    %34 = vector.broadcast %33 : vector<1x1xf32> to vector<8x1xf32>
    %35 = arith.addf %16, %34 : vector<8x1xf32>
    %cst_14 = arith.constant 0.000000e+00 : f32
    %36 = vector.broadcast %cst_14 : f32 to vector<8x1xf32>
    %37 = arith.maximumf %35, %36 : vector<8x1xf32>
    %38 = vector.broadcast %cst_14 : f32 to vector<8x1xf32>
    %39 = arith.subf %35, %38 : vector<8x1xf32>
    %40 = arith.cmpf one, %39, %39 : vector<8x1xf32>
    %41 = vector.broadcast %cst_14 : f32 to vector<8x1xf32>
    %42 = arith.addf %35, %41 : vector<8x1xf32>
    %43 = math.absf %39 : vector<8x1xf32>
    %cst_15 = arith.constant 0.000000e+00 : f32
    %44 = vector.broadcast %cst_15 : f32 to vector<8x1xf32>
    %45 = arith.subf %44, %43 : vector<8x1xf32>
    %46 = math.exp %45 : vector<8x1xf32>
    %47 = math.log1p %46 : vector<8x1xf32>
    %48 = arith.addf %37, %47 : vector<8x1xf32>
    %49 = arith.select %40, %42, %48 : vector<8x1xi1>, vector<8x1xf32>
    %50 = arith.mulf %31, %32 : vector<8x16xf32>
    %cst_16 = arith.constant dense<0.000000e+00> : vector<8xf32>
    %51 = vector.multi_reduction <add>, %50, %cst_16 [1] : vector<8x16xf32> to vector<8xf32>
    %52 = vector.shape_cast %51 : vector<8xf32> to vector<8x1xf32>
    %53 = arith.mulf %49, %52 : vector<8x1xf32>
    %c0_17 = arith.constant 0 : index
    %c0_18 = arith.constant 0 : index
    %54 = vector.load %arg7[%c0_17, %c0_18] : memref<1x1xf32, #tpu.memory_space<vmem>>, vector<1x1xf32>
    %55 = vector.broadcast %54 : vector<1x1xf32> to vector<8x1xf32>
    %56 = arith.addf %53, %55 : vector<8x1xf32>
    %57 = vector.broadcast %56 : vector<8x1xf32> to vector<8x64xf32>
    %58 = arith.mulf %30, %57 : vector<8x64xf32>
    %59 = arith.negf %17 : vector<8x64xf32>
    %60 = math.exp %59 : vector<8x64xf32>
    %cst_19 = arith.constant 1.000000e+00 : f32
    %61 = vector.broadcast %cst_19 : f32 to vector<8x64xf32>
    %62 = arith.addf %61, %60 : vector<8x64xf32>
    %63 = arith.divf %61, %62 : vector<8x64xf32>
    %64 = arith.mulf %17, %63 : vector<8x64xf32>
    %65 = arith.mulf %58, %64 : vector<8x64xf32>
    %66 = arith.mulf %65, %65 : vector<8x64xf32>
    %cst_20 = arith.constant dense<0.000000e+00> : vector<8xf32>
    %67 = vector.multi_reduction <add>, %66, %cst_20 [1] : vector<8x64xf32> to vector<8xf32>
    %68 = vector.shape_cast %67 : vector<8xf32> to vector<8x1xf32>
    %cst_21 = arith.constant 6.400000e+01 : f32
    %69 = vector.broadcast %cst_21 : f32 to vector<8x1xf32>
    %70 = arith.divf %68, %69 : vector<8x1xf32>
    %cst_22 = arith.constant 9.99999974E-6 : f32
    %71 = vector.broadcast %cst_22 : f32 to vector<8x1xf32>
    %72 = arith.addf %70, %71 : vector<8x1xf32>
    %73 = math.rsqrt %72 : vector<8x1xf32>
    %74 = vector.broadcast %73 : vector<8x1xf32> to vector<8x64xf32>
    %75 = arith.mulf %65, %74 : vector<8x64xf32>
    %c0_23 = arith.constant 0 : index
    %c0_24 = arith.constant 0 : index
    %76 = vector.load %arg8[%c0_23, %c0_24] : memref<1x64xf32, #tpu.memory_space<vmem>>, vector<1x64xf32>
    %77 = vector.broadcast %76 : vector<1x64xf32> to vector<8x64xf32>
    %78 = arith.mulf %75, %77 : vector<8x64xf32>
    %79 = arith.truncf %78 : vector<8x64xf32> to vector<8x64xbf16>
    %c0_25 = arith.constant 0 : index
    %c0_26 = arith.constant 0 : index
    %80 = vector.load %arg9[%c0_25, %c0_26] : memref<64x32xbf16, #tpu.memory_space<vmem>>, vector<64x32xbf16>
    %cst_27 = arith.constant dense<0.000000e+00> : vector<8x32xf32>
    %81 = tpu.matmul %79, %80, %cst_27 {dimension_numbers = #tpu.dot_dimension_numbers<[1], [0], [0], [1], [0, 0, 1, 1], [], []>} : vector<8x64xbf16>, vector<64x32xbf16>, vector<8x32xf32> -> vector<8x32xf32>
    %82 = arith.addf %0, %81 : vector<8x32xf32>
    %c0_28 = arith.constant 0 : index
    %c0_29 = arith.constant 0 : index
    %83 = vector.load %arg10[%c0_28, %c0_29] : memref<1x32xf32, #tpu.memory_space<vmem>>, vector<1x32xf32>
    %84 = arith.mulf %82, %82 : vector<8x32xf32>
    %cst_30 = arith.constant dense<0.000000e+00> : vector<8xf32>
    %85 = vector.multi_reduction <add>, %84, %cst_30 [1] : vector<8x32xf32> to vector<8xf32>
    %86 = vector.shape_cast %85 : vector<8xf32> to vector<8x1xf32>
    %cst_31 = arith.constant 9.99999997E-7 : f32
    %87 = vector.broadcast %cst_31 : f32 to vector<8x1xf32>
    %88 = arith.addf %86, %87 : vector<8x1xf32>
    %89 = math.rsqrt %88 : vector<8x1xf32>
    %90 = vector.broadcast %89 : vector<8x1xf32> to vector<8x32xf32>
    %91 = arith.mulf %82, %90 : vector<8x32xf32>
    %92 = vector.broadcast %83 : vector<1x32xf32> to vector<8x32xf32>
    %93 = arith.mulf %91, %92 : vector<8x32xf32>
    %94 = arith.truncf %93 : vector<8x32xf32> to vector<8x32xbf16>
    %c0_32 = arith.constant 0 : index
    %c0_33 = arith.constant 0 : index
    %95 = vector.load %arg11[%c0_32, %c0_33] : memref<32x128xbf16, #tpu.memory_space<vmem>>, vector<32x128xbf16>
    %cst_34 = arith.constant dense<0.000000e+00> : vector<8x128xf32>
    %96 = tpu.matmul %94, %95, %cst_34 {dimension_numbers = #tpu.dot_dimension_numbers<[1], [0], [0], [1], [0, 0, 1, 1], [], []>} : vector<8x32xbf16>, vector<32x128xbf16>, vector<8x128xf32> -> vector<8x128xf32>
    %c0_35 = arith.constant 0 : index
    %c0_36 = arith.constant 0 : index
    %97 = vector.load %arg12[%c0_35, %c0_36] : memref<1x128xf32, #tpu.memory_space<vmem>>, vector<1x128xf32>
    %98 = vector.broadcast %97 : vector<1x128xf32> to vector<8x128xf32>
    %99 = arith.addf %96, %98 : vector<8x128xf32>
    %cst_37 = arith.constant 5.000000e-01 : f32
    %100 = vector.broadcast %cst_37 : f32 to vector<8x128xf32>
    %101 = arith.mulf %100, %99 : vector<8x128xf32>
    %cst_38 = arith.constant 0.707106769 : f32
    %102 = vector.broadcast %cst_38 : f32 to vector<8x128xf32>
    %103 = arith.mulf %99, %102 : vector<8x128xf32>
    %104 = math.erf %103 : vector<8x128xf32>
    %cst_39 = arith.constant 1.000000e+00 : f32
    %105 = vector.broadcast %cst_39 : f32 to vector<8x128xf32>
    %106 = arith.addf %105, %104 : vector<8x128xf32>
    %107 = arith.mulf %101, %106 : vector<8x128xf32>
    %108 = arith.truncf %107 : vector<8x128xf32> to vector<8x128xbf16>
    %c0_40 = arith.constant 0 : index
    %c0_41 = arith.constant 0 : index
    %109 = vector.load %arg13[%c0_40, %c0_41] : memref<128x32xbf16, #tpu.memory_space<vmem>>, vector<128x32xbf16>
    %cst_42 = arith.constant dense<0.000000e+00> : vector<8x32xf32>
    %110 = tpu.matmul %108, %109, %cst_42 {dimension_numbers = #tpu.dot_dimension_numbers<[1], [0], [0], [1], [0, 0, 1, 1], [], []>} : vector<8x128xbf16>, vector<128x32xbf16>, vector<8x32xf32> -> vector<8x32xf32>
    %c0_43 = arith.constant 0 : index
    %c0_44 = arith.constant 0 : index
    %111 = vector.load %arg14[%c0_43, %c0_44] : memref<1x32xf32, #tpu.memory_space<vmem>>, vector<1x32xf32>
    %112 = vector.broadcast %111 : vector<1x32xf32> to vector<8x32xf32>
    %113 = arith.addf %110, %112 : vector<8x32xf32>
    %114 = arith.addf %82, %113 : vector<8x32xf32>
    %115 = arith.addf %0, %114 : vector<8x32xf32>
    %116 = arith.truncf %115 : vector<8x32xf32> to vector<8x32xbf16>
    %c0_45 = arith.constant 0 : index
    %c0_46 = arith.constant 0 : index
    %117 = vector.load %arg15[%c0_45, %c0_46] : memref<32x128xbf16, #tpu.memory_space<vmem>>, vector<32x128xbf16>
    %cst_47 = arith.constant dense<0.000000e+00> : vector<8x128xf32>
    %118 = tpu.matmul %116, %117, %cst_47 {dimension_numbers = #tpu.dot_dimension_numbers<[1], [0], [0], [1], [0, 0, 1, 1], [], []>} : vector<8x32xbf16>, vector<32x128xbf16>, vector<8x128xf32> -> vector<8x128xf32>
    %c0_48 = arith.constant 0 : index
    %c0_49 = arith.constant 0 : index
    %119 = vector.load %arg16[%c0_48, %c0_49] : memref<1x128xf32, #tpu.memory_space<vmem>>, vector<1x128xf32>
    %120 = vector.broadcast %119 : vector<1x128xf32> to vector<8x128xf32>
    %121 = arith.addf %118, %120 : vector<8x128xf32>
    %122 = arith.truncf %121 : vector<8x128xf32> to vector<8x128xbf16>
    %c0_50 = arith.constant 0 : index
    %c0_51 = arith.constant 0 : index
    %123 = vector.load %arg17[%c0_50, %c0_51] : memref<8x128xbf16, #tpu.memory_space<vmem>>, vector<8x128xbf16>
    tpu.vector_store %arg17[%c0_50, %c0_51], %122 {strides = array<i32>} : memref<8x128xbf16, #tpu.memory_space<vmem>>, vector<8x128xbf16>,
    return
  }
  func.func @transform_0(%arg0: i32) -> (i32, i32) {
    %c0_i32 = arith.constant 0 : i32
    %c0_i32_0 = arith.constant 0 : i32
    return %arg0, %c0_i32 : i32, i32
  }
  func.func @transform_1(%arg0: i32) -> (i32, i32) {
    %c0_i32 = arith.constant 0 : i32
    %c0_i32_0 = arith.constant 0 : i32
    %c0_i32_1 = arith.constant 0 : i32
    return %c0_i32, %c0_i32_0 : i32, i32
  }
  func.func @transform_2(%arg0: i32) -> (i32, i32) {
    %c0_i32 = arith.constant 0 : i32
    %c0_i32_0 = arith.constant 0 : i32
    %c0_i32_1 = arith.constant 0 : i32
    return %c0_i32, %c0_i32_0 : i32, i32
  }
  func.func @transform_3(%arg0: i32) -> (i32, i32) {
    %c0_i32 = arith.constant 0 : i32
    %c0_i32_0 = arith.constant 0 : i32
    %c0_i32_1 = arith.constant 0 : i32
    return %c0_i32, %c0_i32_0 : i32, i32
  }
  func.func @transform_4(%arg0: i32) -> (i32, i32) {
    %c0_i32 = arith.constant 0 : i32
    %c0_i32_0 = arith.constant 0 : i32
    %c0_i32_1 = arith.constant 0 : i32
    return %c0_i32, %c0_i32_0 : i32, i32
  }
  func.func @transform_5(%arg0: i32) -> (i32, i32) {
    %c0_i32 = arith.constant 0 : i32
    %c0_i32_0 = arith.constant 0 : i32
    %c0_i32_1 = arith.constant 0 : i32
    return %c0_i32, %c0_i32_0 : i32, i32
  }
  func.func @transform_6(%arg0: i32) -> (i32, i32) {
    %c0_i32 = arith.constant 0 : i32
    %c0_i32_0 = arith.constant 0 : i32
    %c0_i32_1 = arith.constant 0 : i32
    return %c0_i32, %c0_i32_0 : i32, i32
  }
  func.func @transform_7(%arg0: i32) -> (i32, i32) {
    %c0_i32 = arith.constant 0 : i32
    %c0_i32_0 = arith.constant 0 : i32
    %c0_i32_1 = arith.constant 0 : i32
    return %c0_i32, %c0_i32_0 : i32, i32
  }
  func.func @transform_8(%arg0: i32) -> (i32, i32) {
    %c0_i32 = arith.constant 0 : i32
    %c0_i32_0 = arith.constant 0 : i32
    %c0_i32_1 = arith.constant 0 : i32
    return %c0_i32, %c0_i32_0 : i32, i32
  }
  func.func @transform_9(%arg0: i32) -> (i32, i32) {
    %c0_i32 = arith.constant 0 : i32
    %c0_i32_0 = arith.constant 0 : i32
    %c0_i32_1 = arith.constant 0 : i32
    return %c0_i32, %c0_i32_0 : i32, i32
  }
  func.func @transform_10(%arg0: i32) -> (i32, i32) {
    %c0_i32 = arith.constant 0 : i32
    %c0_i32_0 = arith.constant 0 : i32
    %c0_i32_1 = arith.constant 0 : i32
    return %c0_i32, %c0_i32_0 : i32, i32
  }
  func.func @transform_11(%arg0: i32) -> (i32, i32) {
    %c0_i32 = arith.constant 0 : i32
    %c0_i32_0 = arith.constant 0 : i32
    %c0_i32_1 = arith.constant 0 : i32
    return %c0_i32, %c0_i32_0 : i32, i32
  }
  func.func @transform_12(%arg0: i32) -> (i32, i32) {
    %c0_i32 = arith.constant 0 : i32
    %c0_i32_0 = arith.constant 0 : i32
    %c0_i32_1 = arith.constant 0 : i32
    return %c0_i32, %c0_i32_0 : i32, i32
  }
  func.func @transform_13(%arg0: i32) -> (i32, i32) {
    %c0_i32 = arith.constant 0 : i32
    %c0_i32_0 = arith.constant 0 : i32
    %c0_i32_1 = arith.constant 0 : i32
    return %c0_i32, %c0_i32_0 : i32, i32
  }
  func.func @transform_14(%arg0: i32) -> (i32, i32) {
    %c0_i32 = arith.constant 0 : i32
    %c0_i32_0 = arith.constant 0 : i32
    %c0_i32_1 = arith.constant 0 : i32
    return %c0_i32, %c0_i32_0 : i32, i32
  }
  func.func @transform_15(%arg0: i32) -> (i32, i32) {
    %c0_i32 = arith.constant 0 : i32
    %c0_i32_0 = arith.constant 0 : i32
    %c0_i32_1 = arith.constant 0 : i32
    return %c0_i32, %c0_i32_0 : i32, i32
  }
  func.func @transform_16(%arg0: i32) -> (i32, i32) {
    %c0_i32 = arith.constant 0 : i32
    %c0_i32_0 = arith.constant 0 : i32
    return %arg0, %c0_i32 : i32, i32
  }
}

</mosaic_0001>

<llo_original>
// kernel: tpu_custom_call.1
$region0: #{tpu_custom_call.1}
  #allocation0 [shape = 'u32[]', space=smem, size = 0x4, offset = 0x4, fixed_abs, tag = 'smem constant byte address 0x4 - core index']
  #allocation1 [shape = 'u32[144,128]{1,0:T(1,128)}', space=vmem, size = 0x12000, scoped, tag = 'internal scratch']
  #allocation2 [shape = 'f32[1,1]{1,0:T(1,128)S(1)}', space=vmem, size = 0x200, scoped, tag = 'scoped memory for tpu_custom_call.1']
  #allocation3 [shape = 'f32[1,1]{1,0:T(1,128)S(1)}', space=vmem, size = 0x200, scoped, tag = 'scoped memory for tpu_custom_call.1']
  %s0 = inlined_call_operand.vmem [shape: f32[8,32], index: 0, kind: input, shape index: {}]
  %s1 = inlined_call_operand.vmem [shape: f32[1,32], index: 1, kind: input, shape index: {}]
  %s2 = inlined_call_operand.vmem [shape: bf16[32,256], index: 2, kind: input, shape index: {}]
  %s3 = inlined_call_operand.vmem [shape: f32[1,96], index: 3, kind: input, shape index: {}]
  %s4 = inlined_call_operand.vmem [shape: f32[1,96], index: 4, kind: input, shape index: {}]
  %s5 = inlined_call_operand.<no memory space> [shape: f32[1,1], index: 5, kind: input, shape index: {}]
  %s6 = inlined_call_operand.<no memory space> [shape: f32[1,1], index: 6, kind: input, shape index: {}]
  %s7 = inlined_call_operand.vmem [shape: f32[1,64], index: 7, kind: input, shape index: {}]
  %s8 = inlined_call_operand.vmem [shape: bf16[64,32], index: 8, kind: input, shape index: {}]
  %s9 = inlined_call_operand.vmem [shape: f32[1,32], index: 9, kind: input, shape index: {}]
  %s10 = inlined_call_operand.vmem [shape: bf16[32,128], index: 10, kind: input, shape index: {}]
  %s11 = inlined_call_operand.vmem [shape: f32[1,128], index: 11, kind: input, shape index: {}]
  %s12 = inlined_call_operand.vmem [shape: bf16[128,32], index: 12, kind: input, shape index: {}]
  %s13 = inlined_call_operand.vmem [shape: f32[1,32], index: 13, kind: input, shape index: {}]
  %s14 = inlined_call_operand.vmem [shape: bf16[32,128], index: 14, kind: input, shape index: {}]
  %s15 = inlined_call_operand.vmem [shape: f32[1,128], index: 15, kind: input, shape index: {}]
  %s16 = inlined_call_operand.hbm [shape: bf16[8,128], index: 16, kind: output, shape index: {}]
  %s17 = sld [smem:[#allocation0]]
  $region74: #{tpu_custom_call.1} parent=0
    _
  %s19 = ssub.s32 1, %s17
  %s20 = scalar_select 0, %s19, %s17
  %v21 = vstv %s5
  %22 = vst [vmem:[#allocation2] sm:$0x1] %v21
  %v23 = vstv %s6
  %24 = vst [vmem:[#allocation3] sm:$0x1] %v23
  $region1: #{tpu_custom_call.1} parent=0
    #allocation4 [shape = 'u8[2048]{0}', space=vmem, size = 0x800, scoped, tag = 'output window, operand 0, single buffered']
    #allocation5 [shape = 's32[1]{0}', space=sflag, size = 0x4, scoped, tag = 'scoped memory for tpu_custom_call.1']
    %25 = vsyncpa [#allocation5], 0
    // Predicated region
    $region2: #{tpu_custom_call.1} parent=1 // pred_check
      _
    $region3: #{tpu_custom_call.1} parent=1 // pred_check_branch
      %27 = sbr.rel (0) target = $region5
    $region4: #{tpu_custom_call.1} parent=1 // pred_region
      _
    $region5: #{tpu_custom_call.1} parent=1 // pred_fallthru
      _
    // Predicated region
    $region6: #{tpu_custom_call.1} parent=1 // pred_check
      _
    $region7: #{tpu_custom_call.1} parent=1 // pred_check_branch
      %29 = sbr.rel (0) target = $region9
    $region8: #{tpu_custom_call.1} parent=1 // pred_region
      _
    $region9: #{tpu_custom_call.1} parent=1 // pred_fallthru
      _
    // Predicated region
    $region10: #{tpu_custom_call.1} parent=1 // pred_check
      _
    $region11: #{tpu_custom_call.1} parent=1 // pred_check_branch
      %31 = sbr.rel (0) target = $region13
    $region12: #{tpu_custom_call.1} parent=1 // pred_region
      _
    $region13: #{tpu_custom_call.1} parent=1 // pred_fallthru
      _
    // Predicated region
    $region14: #{tpu_custom_call.1} parent=1 // pred_check
      _
    $region15: #{tpu_custom_call.1} parent=1 // pred_check_branch
      %33 = sbr.rel (0) target = $region17
    $region16: #{tpu_custom_call.1} parent=1 // pred_region
      _
    $region17: #{tpu_custom_call.1} parent=1 // pred_fallthru
      _
    // Predicated region
    $region18: #{tpu_custom_call.1} parent=1 // pred_check
      _
    $region19: #{tpu_custom_call.1} parent=1 // pred_check_branch
      %35 = sbr.rel (0) target = $region21
    $region20: #{tpu_custom_call.1} parent=1 // pred_region
      _
    $region21: #{tpu_custom_call.1} parent=1 // pred_fallthru
      _
    // Predicated region
    $region22: #{tpu_custom_call.1} parent=1 // pred_check
      _
    $region23: #{tpu_custom_call.1} parent=1 // pred_check_branch
      %37 = sbr.rel (0) target = $region25
    $region24: #{tpu_custom_call.1} parent=1 // pred_region
      _
    $region25: #{tpu_custom_call.1} parent=1 // pred_fallthru
      _
    // Predicated region
    $region26: #{tpu_custom_call.1} parent=1 // pred_check
      _
    $region27: #{tpu_custom_call.1} parent=1 // pred_check_branch
      %39 = sbr.rel (0) target = $region29
    $region28: #{tpu_custom_call.1} parent=1 // pred_region
      _
    $region29: #{tpu_custom_call.1} parent=1 // pred_fallthru
      _
    // Predicated region
    $region30: #{tpu_custom_call.1} parent=1 // pred_check
      _
    $region31: #{tpu_custom_call.1} parent=1 // pred_check_branch
      %41 = sbr.rel (0) target = $region33
    $region32: #{tpu_custom_call.1} parent=1 // pred_region
      _
    $region33: #{tpu_custom_call.1} parent=1 // pred_fallthru
      _
    // Predicated region
    $region34: #{tpu_custom_call.1} parent=1 // pred_check
      _
    $region35: #{tpu_custom_call.1} parent=1 // pred_check_branch
      %43 = sbr.rel (0) target = $region37
    $region36: #{tpu_custom_call.1} parent=1 // pred_region
      _
    $region37: #{tpu_custom_call.1} parent=1 // pred_fallthru
      _
    // Predicated region
    $region38: #{tpu_custom_call.1} parent=1 // pred_check
      _
    $region39: #{tpu_custom_call.1} parent=1 // pred_check_branch
      %45 = sbr.rel (0) target = $region41
    $region40: #{tpu_custom_call.1} parent=1 // pred_region
      _
    $region41: #{tpu_custom_call.1} parent=1 // pred_fallthru
      _
    // Predicated region
    $region42: #{tpu_custom_call.1} parent=1 // pred_check
      _
    $region43: #{tpu_custom_call.1} parent=1 // pred_check_branch
      %47 = sbr.rel (0) target = $region45
    $region44: #{tpu_custom_call.1} parent=1 // pred_region
      _
    $region45: #{tpu_custom_call.1} parent=1 // pred_fallthru
      _
    // Predicated region
    $region46: #{tpu_custom_call.1} parent=1 // pred_check
      _
    $region47: #{tpu_custom_call.1} parent=1 // pred_check_branch
      %49 = sbr.rel (0) target = $region49
    $region48: #{tpu_custom_call.1} parent=1 // pred_region
      _
    $region49: #{tpu_custom_call.1} parent=1 // pred_fallthru
      _
    // Predicated region
    $region50: #{tpu_custom_call.1} parent=1 // pred_check
      _
    $region51: #{tpu_custom_call.1} parent=1 // pred_check_branch
      %51 = sbr.rel (0) target = $region53
    $region52: #{tpu_custom_call.1} parent=1 // pred_region
      _
    $region53: #{tpu_custom_call.1} parent=1 // pred_fallthru
      _
    // Predicated region
    $region54: #{tpu_custom_call.1} parent=1 // pred_check
      _
    $region55: #{tpu_custom_call.1} parent=1 // pred_check_branch
      %53 = sbr.rel (0) target = $region57
    $region56: #{tpu_custom_call.1} parent=1 // pred_region
      _
    $region57: #{tpu_custom_call.1} parent=1 // pred_fallthru
      _
    // Predicated region
    $region58: #{tpu_custom_call.1} parent=1 // pred_check
      _
    $region59: #{tpu_custom_call.1} parent=1 // pred_check_branch
      %55 = sbr.rel (0) target = $region61
    $region60: #{tpu_custom_call.1} parent=1 // pred_region
      _
    $region61: #{tpu_custom_call.1} parent=1 // pred_fallthru
      _
    // Predicated region
    $region62: #{tpu_custom_call.1} parent=1 // pred_check
      _
    $region63: #{tpu_custom_call.1} parent=1 // pred_check_branch
      %57 = sbr.rel (0) target = $region65
    $region64: #{tpu_custom_call.1} parent=1 // pred_region
      _
    $region65: #{tpu_custom_call.1} parent=1 // pred_fallthru
      _
    %v59 = vld [vmem:[%s0] sm:$0xff]
    %v60 = vld [vmem:[%s1] sm:$0x1]
    %v61 = vmul.f32 %v59, %v59
    %vm62 = vcmask 261120
    %v63 = vsel %vm62, %v61, 0.0
    %64 = vadd.xlane.f32.xlu0 %v63
    %v65 = vpop.xlane.xlu0 %64
    %v66 = vadd.f32 %v65, 1e-06
    %v67 = vrsqrt.pop %v66
    %v68 = vmul.f32 %v59, %v67
    %v70 = vlaneseq
    %v71 = vshrl.u32 %v70, 7
    %v72 = vsub.s32 0, %v71
    %v73 = vrot.slane %v60, %v72
    %v75 = vmul.f32 %v68, %v73
    %v76 = vpack.c.bf16 %v75, %v75
    %v77 = vld [vmem:[%s2] sm:$0xff]
    %v78 = vld [vmem:[%s2 + $0x8] sm:$0xff]
    %v79 = vld [vmem:[%s2 + $0x10] sm:$0xff]
    %v80 = vld [vmem:[%s2 + $0x18] sm:$0xff]
    %v85 = vunpack.c.l.b16 %v77
    %v86 = vunpack.c.h.b16 %v77
    %v87 = vunpack.c.l.b16 %v78
    %v88 = vunpack.c.h.b16 %v78
    %v89 = vunpack.c.l.b16 %v79
    %v90 = vunpack.c.h.b16 %v79
    %v91 = vunpack.c.l.b16 %v80
    %v92 = vunpack.c.h.b16 %v80
    %v93 = vpack.c.b16 %v87, %v85
    %v94 = vpack.c.b16 %v88, %v86
    %v95 = vpack.c.b16 %v91, %v89
    %v96 = vpack.c.b16 %v92, %v90
    %v102 = vsel %vm62, %v76, 0
    %104 = vmatprep.subr.bf16.mxu0 0
    %105 = vmatpush1.bf16.msra.mxu0 0
    %106 = vmatprep.subr.bf16.mxu0 0
    %107 = vmatpush1.bf16.msra.mxu0 0
    %108 = vmatprep.subr.bf16.mxu0 0
    %109 = vmatpush1.bf16.msra.mxu0 0
    %110 = vmatprep.subr.bf16.mxu0 0
    %111 = vmatpush1.bf16.msra.mxu0 0
    %112 = vmatprep.subr.bf16.mxu0 0
    %113 = vmatpush1.bf16.msra.mxu0 0
    %114 = vmatprep.subr.bf16.mxu0 0
    %115 = vmatpush1.bf16.msra.mxu0 0
    %116 = vmatprep.subr.bf16.mxu0 %v96
    %117 = vmatpush1.bf16.msra.mxu0 %v95
    %118 = vmatprep.subr.bf16.mxu0 %v94
    %119 = vmatpush1.bf16.msra.mxu0 %v93
    %120 = vmatprep.subr.bf16.mxu0 0
    %121 = vmatpush2.bf16.msra.mxu0 0
    %122 = vmatprep.subr.bf16.mxu0 0
    %123 = vmatpush2.bf16.msra.mxu0 0
    %124 = vmatprep.subr.bf16.mxu0 0
    %125 = vmatpush2.bf16.msra.mxu0 0
    %126 = vmatprep.subr.bf16.mxu0 0
    %127 = vmatpush2.bf16.msra.mxu0 0
    %128 = vmatprep.subr.bf16.mxu0 0
    %129 = vmatpush2.bf16.msra.mxu0 0
    %130 = vmatprep.subr.bf16.mxu0 0
    %131 = vmatpush2.bf16.msra.mxu0 0
    %132 = vmatprep.subr.bf16.mxu0 0
    %133 = vmatpush2.bf16.msra.mxu0 0
    %134 = vmatprep.subr.bf16.mxu0 0
    %135 = vmatpush2.bf16.msra.mxu0 0
    %136 = vmatprep.mubr.bf16.mxu0 0
    %137 = vmatmul.mubr.bf16.gmra.mxu0 %v102
    %v138 = vpop.f32.mrf.mxu0
    %v139 = vadd.f32 0.0, %v138
    %v140 = vpop.f32.mrf.mxu0
    %v141 = vadd.f32 0.0, %v140
    %v142 = vpop.f32.mrf.mxu0
    %v143 = vpop.f32.mrf.mxu0
    %144 = vdwg.mxu0
    %v145 = vld [vmem:[%s3] sm:$0x1]
    %v147 = vlaneseq
    %v148 = vshrl.u32 %v147, 7
    %v149 = vsub.s32 0, %v148
    %v150 = vrot.slane %v145, %v149
    %v152 = vmul.f32 %v139, %v150
    %v153 = vld [vmem:[%s4] sm:$0x1]
    %v155 = vlaneseq
    %v156 = vshrl.u32 %v155, 7
    %v157 = vsub.s32 0, %v156
    %v158 = vrot.slane %v153, %v157
    %v160 = vadd.f32 %v152, %v158
    %v161 = vxor.u32 %v160, 2147483648
    %v162 = vmul.f32 %v161, 1.442695
    %v163 = vpow.pop %v162
    %v164 = vadd.f32 %v163, 1.0
    %v165 = vrcp.pop %v164
    %v166 = vmul.f32 1.0, %v165
    %v167 = vmul.f32 %v160, %v166
    %v168 = vld [vmem:[#allocation2] sm:$0x1]
    %v170 = vlaneseq
    %v171 = vshrl.u32 %v170, 7
    %v172 = vsub.s32 0, %v171
    %v173 = vrot.slane %v168, %v172
    %174 = vrot.lane.b32.xlu0 %v173, 96
    %v175 = vpop.permute.xlu0 %174
    %v177 = vadd.f32 %v139, %v175
    %v178 = vmax.f32 %v177, 0.0
    %vm179 = vcmp.ne.f32.partialorder %v177, %v177
    %v180 = vadd.f32 %v177, 0.0
    %v181 = vand.u32 2147483647, %v177
    %v182 = vsub.f32 0.0, %v181
    %v183 = vmul.f32 %v182, 1.442695
    %v184 = vpow.pop %v183
    %v185 = vadd.f32 %v184, 1.0
    %v186 = vlog2.pop %v185
    %v187 = vmul.f32 %v186, 0.6931472
    %v188 = vmul.f32 -0.5, %v184
    %v189 = vadd.f32 %v188, 1.0
    %v190 = vmul.f32 %v189, %v184
    %v191 = vand.u32 2147483647, %v184
    %vm192 = vcmp.lt.f32.partialorder %v191, 0.0004427343
    %v193 = vsel %vm192, %v190, %v187
    %v194 = vadd.f32 %v178, %v193
    %v195 = vsel %vm179, %v180, %v194
    %197 = vrot.lane.b32.xlu0 %v167, 112
    %v198 = vpop.permute.xlu0 %197
    %v200 = vmul.f32 %v167, %v198
    %202 = vrot.lane.b32.xlu0 %v200, 64
    %v203 = vpop.permute.xlu0 %202
    %vm205 = vcmask 130048
    %v206 = vsel %vm205, %v203, 0.0
    %207 = vadd.xlane.f32.xlu0 %v206
    %v208 = vpop.xlane.xlu0 %207
    %v209 = vmul.f32 %v195, %v208
    %v210 = vld [vmem:[#allocation3] sm:$0x1]
    %v212 = vlaneseq
    %v213 = vshrl.u32 %v212, 7
    %v214 = vsub.s32 0, %v213
    %v215 = vrot.slane %v210, %v214
    %216 = vrot.lane.b32.xlu0 %v215, 96
    %v217 = vpop.permute.xlu0 %216
    %v219 = vadd.f32 %v209, %v217
    %221 = vset.pattern.permute.xlu0 96
    %222 = vperm.xlu0 %221, %v219
    %v223 = vpop.permute.xlu0 %222
    %v225 = vmul.f32 %v167, %v223
    %v226 = vxor.u32 %v141, 2147483648
    %v227 = vmul.f32 %v226, 1.442695
    %v228 = vpow.pop %v227
    %v229 = vadd.f32 %v228, 1.0
    %v230 = vrcp.pop %v229
    %v231 = vmul.f32 1.0, %v230
    %v232 = vmul.f32 %v141, %v231
    %v233 = vmul.f32 %v225, %v232
    %v234 = vmul.f32 %v233, %v233
    %vm235 = vcmask 523264
    %v236 = vsel %vm235, %v234, 0.0
    %237 = vadd.xlane.f32.xlu0 %v236
    %v238 = vpop.xlane.xlu0 %237
    %v239 = vrcp.pop 64.0
    %v240 = vmul.f32 %v238, %v239
    %v241 = vadd.f32 %v240, 1e-05
    %v242 = vrsqrt.pop %v241
    %v243 = vmul.f32 %v233, %v242
    %v244 = vld [vmem:[%s7] sm:$0x1]
    %v246 = vlaneseq
    %v247 = vshrl.u32 %v246, 7
    %v248 = vsub.s32 0, %v247
    %v249 = vrot.slane %v244, %v248
    %v251 = vmul.f32 %v243, %v249
    %v252 = vpack.c.bf16 %v251, %v251
    %v253 = vld [vmem:[%s8] sm:$0xf]
    %v254 = vld [vmem:[%s8 + $0x4] sm:$0xf]
    %v255 = vld [vmem:[%s8 + $0x8] sm:$0xf]
    %v256 = vld [vmem:[%s8 + $0xc] sm:$0xf]
    %v257 = vld [vmem:[%s8 + $0x10] sm:$0xf]
    %v258 = vld [vmem:[%s8 + $0x14] sm:$0xf]
    %v259 = vld [vmem:[%s8 + $0x18] sm:$0xf]
    %v260 = vld [vmem:[%s8 + $0x1c] sm:$0xf]
    %v269 = vunpack.c.l.b16 %v253
    %v270 = vunpack.c.l.b16 %v254
    %v271 = vunpack.c.l.b16 %v255
    %v272 = vunpack.c.l.b16 %v256
    %v273 = vunpack.c.l.b16 %v257
    %v274 = vunpack.c.l.b16 %v258
    %v275 = vunpack.c.l.b16 %v259
    %v276 = vunpack.c.l.b16 %v260
    %v277 = vpack.c.b16 %v270, %v269
    %v278 = vpack.c.b16 %v272, %v271
    %v279 = vpack.c.b16 %v274, %v273
    %v280 = vpack.c.b16 %v276, %v275
    %v286 = vsel %vm235, %v252, 0
    %288 = vmatprep.subr.bf16.mxu0 0
    %289 = vmatpush1.bf16.msra.mxu0 0
    %290 = vmatprep.subr.bf16.mxu0 0
    %291 = vmatpush1.bf16.msra.mxu0 0
    %292 = vmatprep.subr.bf16.mxu0 0
    %293 = vmatpush1.bf16.msra.mxu0 0
    %294 = vmatprep.subr.bf16.mxu0 0
    %295 = vmatpush1.bf16.msra.mxu0 0
    %296 = vmatprep.subr.bf16.mxu0 0
    %297 = vmatpush1.bf16.msra.mxu0 %v280
    %298 = vmatprep.subr.bf16.mxu0 0
    %299 = vmatpush1.bf16.msra.mxu0 %v279
    %300 = vmatprep.subr.bf16.mxu0 0
    %301 = vmatpush1.bf16.msra.mxu0 %v278
    %302 = vmatprep.subr.bf16.mxu0 0
    %303 = vmatpush1.bf16.msra.mxu0 %v277
    %304 = vmatprep.subr.bf16.mxu0 0
    %305 = vmatpush2.bf16.msra.mxu0 0
    %306 = vmatprep.subr.bf16.mxu0 0
    %307 = vmatpush2.bf16.msra.mxu0 0
    %308 = vmatprep.subr.bf16.mxu0 0
    %309 = vmatpush2.bf16.msra.mxu0 0
    %310 = vmatprep.subr.bf16.mxu0 0
    %311 = vmatpush2.bf16.msra.mxu0 0
    %312 = vmatprep.subr.bf16.mxu0 0
    %313 = vmatpush2.bf16.msra.mxu0 0
    %314 = vmatprep.subr.bf16.mxu0 0
    %315 = vmatpush2.bf16.msra.mxu0 0
    %316 = vmatprep.subr.bf16.mxu0 0
    %317 = vmatpush2.bf16.msra.mxu0 0
    %318 = vmatprep.subr.bf16.mxu0 0
    %319 = vmatpush2.bf16.msra.mxu0 0
    %320 = vmatprep.mubr.bf16.mxu0 0
    %321 = vmatmul.mubr.bf16.gmra.mxu0 %v286
    %v322 = vpop.f32.mrf.mxu0
    %v323 = vadd.f32 0.0, %v322
    %v324 = vpop.f32.mrf.mxu0
    %v325 = vpop.f32.mrf.mxu0
    %v326 = vpop.f32.mrf.mxu0
    %327 = vdwg.mxu0
    %v328 = vadd.f32 %v59, %v323
    %v329 = vld [vmem:[%s9] sm:$0x1]
    %v330 = vmul.f32 %v328, %v328
    %v331 = vsel %vm62, %v330, 0.0
    %332 = vadd.xlane.f32.xlu0 %v331
    %v333 = vpop.xlane.xlu0 %332
    %v334 = vadd.f32 %v333, 1e-06
    %v335 = vrsqrt.pop %v334
    %v336 = vmul.f32 %v328, %v335
    %v338 = vlaneseq
    %v339 = vshrl.u32 %v338, 7
    %v340 = vsub.s32 0, %v339
    %v341 = vrot.slane %v329, %v340
    %v343 = vmul.f32 %v336, %v341
    %v344 = vpack.c.bf16 %v343, %v343
    %v345 = vld [vmem:[%s10] sm:$0xf]
    %v346 = vld [vmem:[%s10 + $0x4] sm:$0xf]
    %v347 = vld [vmem:[%s10 + $0x8] sm:$0xf]
    %v348 = vld [vmem:[%s10 + $0xc] sm:$0xf]
    %v349 = vld [vmem:[%s11] sm:$0x1]
    %v351 = vlaneseq
    %v352 = vshrl.u32 %v351, 7
    %v353 = vsub.s32 0, %v352
    %v354 = vrot.slane %v349, %v353
    %v360 = vunpack.c.l.b16 %v345
    %v361 = vunpack.c.l.b16 %v346
    %v362 = vunpack.c.l.b16 %v347
    %v363 = vunpack.c.l.b16 %v348
    %v364 = vpack.c.b16 %v361, %v360
    %v365 = vpack.c.b16 %v363, %v362
    %v369 = vsel %vm62, %v344, 0
    %371 = vmatprep.subr.bf16.mxu0 0
    %372 = vmatpush1.bf16.msra.mxu0 0
    %373 = vmatprep.subr.bf16.mxu0 0
    %374 = vmatpush1.bf16.msra.mxu0 0
    %375 = vmatprep.subr.bf16.mxu0 0
    %376 = vmatpush1.bf16.msra.mxu0 0
    %377 = vmatprep.subr.bf16.mxu0 0
    %378 = vmatpush1.bf16.msra.mxu0 0
    %379 = vmatprep.subr.bf16.mxu0 0
    %380 = vmatpush1.bf16.msra.mxu0 0
    %381 = vmatprep.subr.bf16.mxu0 0
    %382 = vmatpush1.bf16.msra.mxu0 0
    %383 = vmatprep.subr.bf16.mxu0 0
    %384 = vmatpush1.bf16.msra.mxu0 %v365
    %385 = vmatprep.subr.bf16.mxu0 0
    %386 = vmatpush1.bf16.msra.mxu0 %v364
    %387 = vmatprep.subr.bf16.mxu0 0
    %388 = vmatpush2.bf16.msra.mxu0 0
    %389 = vmatprep.subr.bf16.mxu0 0
    %390 = vmatpush2.bf16.msra.mxu0 0
    %391 = vmatprep.subr.bf16.mxu0 0
    %392 = vmatpush2.bf16.msra.mxu0 0
    %393 = vmatprep.subr.bf16.mxu0 0
    %394 = vmatpush2.bf16.msra.mxu0 0
    %395 = vmatprep.subr.bf16.mxu0 0
    %396 = vmatpush2.bf16.msra.mxu0 0
    %397 = vmatprep.subr.bf16.mxu0 0
    %398 = vmatpush2.bf16.msra.mxu0 0
    %399 = vmatprep.subr.bf16.mxu0 0
    %400 = vmatpush2.bf16.msra.mxu0 0
    %401 = vmatprep.subr.bf16.mxu0 0
    %402 = vmatpush2.bf16.msra.mxu0 0
    %403 = vmatprep.mubr.bf16.mxu0 0
    %404 = vmatmul.mubr.bf16.gmra.mxu0 %v369
    %v405 = vpop.f32.mrf.mxu0
    %v406 = vadd.f32 %v354, %v405
    %v407 = vpop.f32.mrf.mxu0
    %v408 = vpop.f32.mrf.mxu0
    %v409 = vpop.f32.mrf.mxu0
    %410 = vdwg.mxu0
    %v411 = vmul.f32 %v406, 0.5
    %v412 = vmul.f32 %v406, 0.70710677
    %v413 = verf.f32.pop %v412
    %v414 = vadd.f32 %v413, 1.0
    %v415 = vmul.f32 %v411, %v414
    %v416 = vpack.c.bf16 %v415, %v415
    %v417 = vld [vmem:[%s12] sm:$0xf]
    %v418 = vld [vmem:[%s12 + $0x4] sm:$0xf]
    %v419 = vld [vmem:[%s12 + $0x8] sm:$0xf]
    %v420 = vld [vmem:[%s12 + $0xc] sm:$0xf]
    %v421 = vld [vmem:[%s12 + $0x10] sm:$0xf]
    %v422 = vld [vmem:[%s12 + $0x14] sm:$0xf]
    %v423 = vld [vmem:[%s12 + $0x18] sm:$0xf]
    %v424 = vld [vmem:[%s12 + $0x1c] sm:$0xf]
    %v425 = vld [vmem:[%s12 + $0x20] sm:$0xf]
    %v426 = vld [vmem:[%s12 + $0x24] sm:$0xf]
    %v427 = vld [vmem:[%s12 + $0x28] sm:$0xf]
    %v428 = vld [vmem:[%s12 + $0x2c] sm:$0xf]
    %v429 = vld [vmem:[%s12 + $0x30] sm:$0xf]
    %v430 = vld [vmem:[%s12 + $0x34] sm:$0xf]
    %v431 = vld [vmem:[%s12 + $0x38] sm:$0xf]
    %v432 = vld [vmem:[%s12 + $0x3c] sm:$0xf]
    %v433 = vld [vmem:[%s13] sm:$0x1]
    %v435 = vlaneseq
    %v436 = vshrl.u32 %v435, 7
    %v437 = vsub.s32 0, %v436
    %v438 = vrot.slane %v433, %v437
    %v456 = vunpack.c.l.b16 %v417
    %v457 = vunpack.c.l.b16 %v418
    %v458 = vunpack.c.l.b16 %v419
    %v459 = vunpack.c.l.b16 %v420
    %v460 = vunpack.c.l.b16 %v421
    %v461 = vunpack.c.l.b16 %v422
    %v462 = vunpack.c.l.b16 %v423
    %v463 = vunpack.c.l.b16 %v424
    %v464 = vunpack.c.l.b16 %v425
    %v465 = vunpack.c.l.b16 %v426
    %v466 = vunpack.c.l.b16 %v427
    %v467 = vunpack.c.l.b16 %v428
    %v468 = vunpack.c.l.b16 %v429
    %v469 = vunpack.c.l.b16 %v430
    %v470 = vunpack.c.l.b16 %v431
    %v471 = vunpack.c.l.b16 %v432
    %v472 = vpack.c.b16 %v457, %v456
    %v473 = vpack.c.b16 %v459, %v458
    %v474 = vpack.c.b16 %v461, %v460
    %v475 = vpack.c.b16 %v463, %v462
    %v476 = vpack.c.b16 %v465, %v464
    %v477 = vpack.c.b16 %v467, %v466
    %v478 = vpack.c.b16 %v469, %v468
    %v479 = vpack.c.b16 %v471, %v470
    %488 = vmatprep.subr.bf16.mxu0 0
    %489 = vmatpush1.bf16.msra.mxu0 %v479
    %490 = vmatprep.subr.bf16.mxu0 0
    %491 = vmatpush1.bf16.msra.mxu0 %v478
    %492 = vmatprep.subr.bf16.mxu0 0
    %493 = vmatpush1.bf16.msra.mxu0 %v477
    %494 = vmatprep.subr.bf16.mxu0 0
    %495 = vmatpush1.bf16.msra.mxu0 %v476
    %496 = vmatprep.subr.bf16.mxu0 0
    %497 = vmatpush1.bf16.msra.mxu0 %v475
    %498 = vmatprep.subr.bf16.mxu0 0
    %499 = vmatpush1.bf16.msra.mxu0 %v474
    %500 = vmatprep.subr.bf16.mxu0 0
    %501 = vmatpush1.bf16.msra.mxu0 %v473
    %502 = vmatprep.subr.bf16.mxu0 0
    %503 = vmatpush1.bf16.msra.mxu0 %v472
    %504 = vmatprep.subr.bf16.mxu0 0
    %505 = vmatpush2.bf16.msra.mxu0 0
    %506 = vmatprep.subr.bf16.mxu0 0
    %507 = vmatpush2.bf16.msra.mxu0 0
    %508 = vmatprep.subr.bf16.mxu0 0
    %509 = vmatpush2.bf16.msra.mxu0 0
    %510 = vmatprep.subr.bf16.mxu0 0
    %511 = vmatpush2.bf16.msra.mxu0 0
    %512 = vmatprep.subr.bf16.mxu0 0
    %513 = vmatpush2.bf16.msra.mxu0 0
    %514 = vmatprep.subr.bf16.mxu0 0
    %515 = vmatpush2.bf16.msra.mxu0 0
    %516 = vmatprep.subr.bf16.mxu0 0
    %517 = vmatpush2.bf16.msra.mxu0 0
    %518 = vmatprep.subr.bf16.mxu0 0
    %519 = vmatpush2.bf16.msra.mxu0 0
    %520 = vmatprep.mubr.bf16.mxu0 0
    %521 = vmatmul.mubr.bf16.gmra.mxu0 %v416
    %v522 = vpop.f32.mrf.mxu0
    %v523 = vadd.f32 %v438, %v522
    %v524 = vpop.f32.mrf.mxu0
    %v525 = vpop.f32.mrf.mxu0
    %v526 = vpop.f32.mrf.mxu0
    %527 = vdwg.mxu0
    %v528 = vadd.f32 %v328, %v523
    %v529 = vadd.f32 %v59, %v528
    %v530 = vpack.c.bf16 %v529, %v529
    %v531 = vld [vmem:[%s14] sm:$0xf]
    %v532 = vld [vmem:[%s14 + $0x4] sm:$0xf]
    %v533 = vld [vmem:[%s14 + $0x8] sm:$0xf]
    %v534 = vld [vmem:[%s14 + $0xc] sm:$0xf]
    %v535 = vld [vmem:[%s15] sm:$0x1]
    %v537 = vlaneseq
    %v538 = vshrl.u32 %v537, 7
    %v539 = vsub.s32 0, %v538
    %v540 = vrot.slane %v535, %v539
    %v546 = vunpack.c.l.b16 %v531
    %v547 = vunpack.c.l.b16 %v532
    %v548 = vunpack.c.l.b16 %v533
    %v549 = vunpack.c.l.b16 %v534
    %v550 = vpack.c.b16 %v547, %v546
    %v551 = vpack.c.b16 %v549, %v548
    %v555 = vsel %vm62, %v530, 0
    %557 = vmatprep.subr.bf16.mxu0 0
    %558 = vmatpush1.bf16.msra.mxu0 0
    %559 = vmatprep.subr.bf16.mxu0 0
    %560 = vmatpush1.bf16.msra.mxu0 0
    %561 = vmatprep.subr.bf16.mxu0 0
    %562 = vmatpush1.bf16.msra.mxu0 0
    %563 = vmatprep.subr.bf16.mxu0 0
    %564 = vmatpush1.bf16.msra.mxu0 0
    %565 = vmatprep.subr.bf16.mxu0 0
    %566 = vmatpush1.bf16.msra.mxu0 0
    %567 = vmatprep.subr.bf16.mxu0 0
    %568 = vmatpush1.bf16.msra.mxu0 0
    %569 = vmatprep.subr.bf16.mxu0 0
    %570 = vmatpush1.bf16.msra.mxu0 %v551
    %571 = vmatprep.subr.bf16.mxu0 0
    %572 = vmatpush1.bf16.msra.mxu0 %v550
    %573 = vmatprep.subr.bf16.mxu0 0
    %574 = vmatpush2.bf16.msra.mxu0 0
    %575 = vmatprep.subr.bf16.mxu0 0
    %576 = vmatpush2.bf16.msra.mxu0 0
    %577 = vmatprep.subr.bf16.mxu0 0
    %578 = vmatpush2.bf16.msra.mxu0 0
    %579 = vmatprep.subr.bf16.mxu0 0
    %580 = vmatpush2.bf16.msra.mxu0 0
    %581 = vmatprep.subr.bf16.mxu0 0
    %582 = vmatpush2.bf16.msra.mxu0 0
    %583 = vmatprep.subr.bf16.mxu0 0
    %584 = vmatpush2.bf16.msra.mxu0 0
    %585 = vmatprep.subr.bf16.mxu0 0
    %586 = vmatpush2.bf16.msra.mxu0 0
    %587 = vmatprep.subr.bf16.mxu0 0
    %588 = vmatpush2.bf16.msra.mxu0 0
    %589 = vmatprep.mubr.bf16.mxu0 0
    %590 = vmatmul.mubr.bf16.gmra.mxu0 %v555
    %v591 = vpop.f32.mrf.mxu0
    %v592 = vadd.f32 %v540, %v591
    %v593 = vpop.f32.mrf.mxu0
    %v594 = vpop.f32.mrf.mxu0
    %v595 = vpop.f32.mrf.mxu0
    %596 = vdwg.mxu0
    %v597 = vpack.c.bf16 %v592, %v592
    %598 = vst [vmem:[#allocation4] sm:$0xf] %v597
    // Predicated region
    $region66: #{tpu_custom_call.1} parent=1 // pred_check
      _
    $region67: #{tpu_custom_call.1} parent=1 // pred_check_branch
      %600 = sbr.rel (0) target = $region69
    $region68: #{tpu_custom_call.1} parent=1 // pred_region
      %s602 = ssub.s32 64, 64
      %603 = vsyncadd [#allocation5], %s602
      %s605 = sshll.u32 [#allocation4], 4
      %s606 = int_to_ptr.vmem [resolvable:$true] %s605
      %608 = dma.vmem_to_hbm [thread:$0]  %s606, 64, %s16, [#allocation5]
    $region69: #{tpu_custom_call.1} parent=1 // pred_fallthru
      _
    // Predicated region
    $region70: #{tpu_custom_call.1} parent=1 // pred_check
      _
    $region71: #{tpu_custom_call.1} parent=1 // pred_check_branch
      %610 = sbr.rel (0) target = $region73
    $region72: #{tpu_custom_call.1} parent=1 // pred_region
      %611 = dma.done [#allocation5], 64
    $region73: #{tpu_custom_call.1} parent=1 // pred_fallthru
      _
    %612 = vsyncpa [#allocation5], 1

</llo_original>
